<compile_context>
chip_gen: v7x
topology: tpu7x:2x2x1
jax: 0.10.0
libtpu: 0.0.40
codegen_flags: <defaults>
</compile_context>

<pallas_src>
from functools import partial

import jax
import jax.numpy as jnp
from jax.experimental import pallas as pl
from jax.experimental.pallas import tpu as pltpu


_PACK = 8  # rows packed into the lane axis; 8 * hidden(16) = 128 lanes exactly.


def _round_up(v, m):
    return ((v + m - 1) // m) * m


def _pick_tile(bp, tbp_max):
    """Pick the batch tile (in packed rows)."""
    if bp < 256:
        # Small problem (< ~2K original rows): one full-extent block; splitting
        # only adds ~0.35us/step fixed overhead.
        return bp
    # Aim for >=4 grid steps so ("parallel",) can use both TensorCores on v7x
    # and the x DMA pipeline has work to overlap, but keep tiles big enough to
    # amortize per-step overhead and capped so double-buffered VMEM stays small.
    t = _round_up(pl.cdiv(bp, 4), 8)
    return max(128, min(t, tbp_max))


def _mlp_kernel(x_ref, w1_ref, b1_ref, w2_ref, b2_ref, o_ref, *, use_bf16):
    # x_ref:  [TBp, P*D]   packed input rows (lane-dense, P*D multiple of 128)
    # w1_ref: [P*D, P*H]   block-diagonal W1 (resident)
    # b1_ref: [1,  P*H]    tiled bias 1 (resident)
    # w2_ref: [P*H, P]     block-diagonal W2 (resident)
    # b2_ref: [1, 1]       bias 2 (resident)
    # o_ref:  [TBp, P]     output (packed rows x P lanes)
    x = x_ref[...]
    w1 = w1_ref[...]
    if use_bf16:
        x = x.astype(jnp.bfloat16)
        w1 = w1.astype(jnp.bfloat16)
    h = jnp.dot(x, w1, preferred_element_type=jnp.float32)      # [TBp, P*H]
    h = jnp.maximum(h + b1_ref[...], 0.0)                        # lane-dense ReLU
    y = jnp.dot(h, w2_ref[...], preferred_element_type=jnp.float32)  # [TBp, P]
    o_ref[...] = (y + b2_ref[...]).astype(o_ref.dtype)


def linear_regression_forward(x, w1, b1, w2, b2, *, tbp_max=2048, use_bf16=False):
    """x: [B, D] float32 -> torch.squeeze of (Linear->ReLU->Linear)(x), i.e. [B]
    (0-d scalar when B == 1)."""
    B, D = x.shape
    H = w1.shape[1]                     # 16
    assert w1.shape == (D, H)
    assert w2.shape == (H, 1), "model spec is Linear(16, 1)"
    P = _PACK

    # --- wrapper-side layout plumbing (cheap / free) -------------------------
    Bpad = _round_up(B, P)
    if Bpad != B:
        # Zero-pad so rows pack evenly; padded rows are computed on but sliced
        # off below (rows are independent, so this is safe).
        x = jnp.pad(x, ((0, Bpad - B), (0, 0)))
    Bp = Bpad // P
    xp = x.reshape(Bp, P * D)                                   # free reshape

    eye_p = jnp.eye(P, dtype=w1.dtype)
    w1_blk = jnp.kron(eye_p, w1)                                # [P*D, P*H]
    w2_blk = jnp.kron(eye_p, w2)                                # [P*H, P]
    b1_row = jnp.tile(jnp.reshape(b1, (1, H)), (1, P))          # [1, P*H]
    b2_val = jnp.reshape(b2, (1, 1))                            # [1, 1]

    TBp = _pick_tile(Bp, tbp_max)
    grid = (pl.cdiv(Bp, TBp),)

    out = pl.pallas_call(
        partial(_mlp_kernel, use_bf16=use_bf16),
        out_shape=jax.ShapeDtypeStruct((Bp, P), jnp.float32),
        grid=grid,
        in_specs=[
            pl.BlockSpec((TBp, P * D), lambda i: (i, 0)),   # x packed (tiled over batch)
            pl.BlockSpec((P * D, P * H), lambda i: (0, 0)),  # W1 block-diag (resident)
            pl.BlockSpec((1, P * H), lambda i: (0, 0)),      # b1 tiled      (resident)
            pl.BlockSpec((P * H, P), lambda i: (0, 0)),      # W2 block-diag (resident)
            pl.BlockSpec((1, 1), lambda i: (0, 0)),          # b2            (resident)
        ],
        out_specs=pl.BlockSpec((TBp, P), lambda i: (i, 0)),
        compiler_params=pltpu.CompilerParams(
            dimension_semantics=("parallel",),              # v7x: shard batch over 2 TCs
            vmem_limit_bytes=32 * 1024 * 1024,              # within physical VMEM on v5e/v6e/v7x
        ),
    )(xp, w1_blk, b1_row, w2_blk, b2_val)

    # [Bp, P] is the flat batch order row-major -> [Bpad] -> drop padding.
    y = out.reshape(Bpad)[:B]
    # torch.squeeze removes all size-1 dims: [B] (0-d if B == 1).
    return jnp.squeeze(y)


def init_params(key, input_size, hidden=16, out=1):
    """Deterministic init mimicking nn.Linear's uniform(-1/sqrt(fan_in), +)."""
    k1, k2, k3, k4 = jax.random.split(key, 4)
    lim1 = 1.0 / jnp.sqrt(jnp.float32(input_size))
    lim2 = 1.0 / jnp.sqrt(jnp.float32(hidden))
    w1 = jax.random.uniform(k1, (input_size, hidden), jnp.float32, -lim1, lim1)
    b1 = jax.random.uniform(k2, (1, hidden), jnp.float32, -lim1, lim1)
    w2 = jax.random.uniform(k3, (hidden, out), jnp.float32, -lim2, lim2)
    b2 = jax.random.uniform(k4, (1, out), jnp.float32, -lim2, lim2)
    return w1, b1, w2, b2


def _reference(x, w1, b1, w2, b2):
    return jnp.squeeze(jnp.maximum(x @ w1 + b1, 0.0) @ w2 + b2)


if __name__ == "__main__":
    key = jax.random.PRNGKey(0)
    kx, kx2, kx3, kp = jax.random.split(key, 4)

    # Small shape consistent with the module.
    batch, input_size = 8, 32
    x = jax.random.normal(kx, (batch, input_size), jnp.float32)
    w1, b1, w2, b2 = init_params(kp, input_size)

    y = linear_regression_forward(x, w1, b1, w2, b2)
    jax.block_until_ready(y)
    y_ref = _reference(x, w1, b1, w2, b2)
    assert y.shape == (batch,), y.shape
    assert jnp.allclose(y, y_ref, atol=1e-5, rtol=1e-5)

    # Larger batch: exercises multi-step grid, partial last block, and
    # B not divisible by the pack factor (zero-pad path).
    batch2 = 8203
    x2 = jax.random.normal(kx2, (batch2, input_size), jnp.float32)
    y2 = linear_regression_forward(x2, w1, b1, w2, b2)
    jax.block_until_ready(y2)
    y2_ref = _reference(x2, w1, b1, w2, b2)
    assert y2.shape == (batch2,), y2.shape
    assert jnp.allclose(y2, y2_ref, atol=1e-5, rtol=1e-5)

    # B == 1: torch.squeeze gives a 0-d scalar.
    x3 = jax.random.normal(kx3, (1, input_size), jnp.float32)
    y3 = linear_regression_forward(x3, w1, b1, w2, b2)
    jax.block_until_ready(y3)
    y3_ref = _reference(x3, w1, b1, w2, b2)
    assert y3.shape == (), y3.shape
    assert jnp.allclose(y3, y3_ref, atol=1e-5, rtol=1e-5)

    print("KERNEL_OK")
</pallas_src>

<mosaic_0001>
module attributes {stable_mosaic.version = 11 : i64} {
  func.func @_mlp_kernel(%arg0: i32, %arg1: memref<1x256xf32, #tpu.memory_space<vmem>>, %arg2: memref<256x128xf32, #tpu.memory_space<vmem>>, %arg3: memref<1x128xf32, #tpu.memory_space<vmem>>, %arg4: memref<128x8xf32, #tpu.memory_space<vmem>>, %arg5: memref<1x1xf32, #tpu.memory_space<vmem>>, %arg6: memref<1x8xf32, #tpu.memory_space<vmem>>) attributes {dimension_semantics = [#tpu.dimension_semantics<parallel>], iteration_bounds = array<i64: 1>, scalar_prefetch = 0 : i64, scratch_operands = 0 : i64, tpu.core_type = #tpu.core_type<tc>, window_params = [{transform_indices = @transform_0, window_bounds = array<i64: 1, 256>}, {pipeline_mode = #tpu.pipeline_mode<synchronous>, transform_indices = @transform_1, window_bounds = array<i64: 256, 128>}, {pipeline_mode = #tpu.pipeline_mode<synchronous>, transform_indices = @transform_2, window_bounds = array<i64: 1, 128>}, {pipeline_mode = #tpu.pipeline_mode<synchronous>, transform_indices = @transform_3, window_bounds = array<i64: 128, 8>}, {pipeline_mode = #tpu.pipeline_mode<synchronous>, transform_indices = @transform_4, window_bounds = array<i64: 1, 1>}, {transform_indices = @transform_5, window_bounds = array<i64: 1, 8>}]} {
    %c0 = arith.constant 0 : index
    %c0_0 = arith.constant 0 : index
    %0 = vector.load %arg1[%c0, %c0_0] : memref<1x256xf32, #tpu.memory_space<vmem>>, vector<1x256xf32>
    %c0_1 = arith.constant 0 : index
    %c0_2 = arith.constant 0 : index
    %1 = vector.load %arg2[%c0_1, %c0_2] : memref<256x128xf32, #tpu.memory_space<vmem>>, vector<256x128xf32>
    %cst = arith.constant dense<0.000000e+00> : vector<1x128xf32>
    %2 = tpu.matmul %0, %1, %cst {dimension_numbers = #tpu.dot_dimension_numbers<[1], [0], [0], [1], [0, 0, 1, 1], [], []>} : vector<1x256xf32>, vector<256x128xf32>, vector<1x128xf32> -> vector<1x128xf32>
    %c0_3 = arith.constant 0 : index
    %c0_4 = arith.constant 0 : index
    %3 = vector.load %arg3[%c0_3, %c0_4] : memref<1x128xf32, #tpu.memory_space<vmem>>, vector<1x128xf32>
    %4 = arith.addf %2, %3 : vector<1x128xf32>
    %cst_5 = arith.constant 0.000000e+00 : f32
    %5 = vector.broadcast %cst_5 : f32 to vector<1x128xf32>
    %6 = arith.maximumf %4, %5 : vector<1x128xf32>
    %c0_6 = arith.constant 0 : index
    %c0_7 = arith.constant 0 : index
    %7 = vector.load %arg4[%c0_6, %c0_7] : memref<128x8xf32, #tpu.memory_space<vmem>>, vector<128x8xf32>
    %cst_8 = arith.constant dense<0.000000e+00> : vector<1x8xf32>
    %8 = tpu.matmul %6, %7, %cst_8 {dimension_numbers = #tpu.dot_dimension_numbers<[1], [0], [0], [1], [0, 0, 1, 1], [], []>} : vector<1x128xf32>, vector<128x8xf32>, vector<1x8xf32> -> vector<1x8xf32>
    %c0_9 = arith.constant 0 : index
    %c0_10 = arith.constant 0 : index
    %9 = vector.load %arg5[%c0_9, %c0_10] : memref<1x1xf32, #tpu.memory_space<vmem>>, vector<1x1xf32>
    %10 = vector.broadcast %9 : vector<1x1xf32> to vector<1x8xf32>
    %11 = arith.addf %8, %10 : vector<1x8xf32>
    %c0_11 = arith.constant 0 : index
    %c0_12 = arith.constant 0 : index
    %12 = vector.load %arg6[%c0_11, %c0_12] : memref<1x8xf32, #tpu.memory_space<vmem>>, vector<1x8xf32>
    tpu.vector_store %arg6[%c0_11, %c0_12], %11 {strides = array<i32>} : memref<1x8xf32, #tpu.memory_space<vmem>>, vector<1x8xf32>,
    return
  }
  func.func @transform_0(%arg0: i32) -> (i32, i32) {
    %c0_i32 = arith.constant 0 : i32
    %c0_i32_0 = arith.constant 0 : i32
    return %arg0, %c0_i32 : i32, i32
  }
  func.func @transform_1(%arg0: i32) -> (i32, i32) {
    %c0_i32 = arith.constant 0 : i32
    %c0_i32_0 = arith.constant 0 : i32
    %c0_i32_1 = arith.constant 0 : i32
    return %c0_i32, %c0_i32_0 : i32, i32
  }
  func.func @transform_2(%arg0: i32) -> (i32, i32) {
    %c0_i32 = arith.constant 0 : i32
    %c0_i32_0 = arith.constant 0 : i32
    %c0_i32_1 = arith.constant 0 : i32
    return %c0_i32, %c0_i32_0 : i32, i32
  }
  func.func @transform_3(%arg0: i32) -> (i32, i32) {
    %c0_i32 = arith.constant 0 : i32
    %c0_i32_0 = arith.constant 0 : i32
    %c0_i32_1 = arith.constant 0 : i32
    return %c0_i32, %c0_i32_0 : i32, i32
  }
  func.func @transform_4(%arg0: i32) -> (i32, i32) {
    %c0_i32 = arith.constant 0 : i32
    %c0_i32_0 = arith.constant 0 : i32
    %c0_i32_1 = arith.constant 0 : i32
    return %c0_i32, %c0_i32_0 : i32, i32
  }
  func.func @transform_5(%arg0: i32) -> (i32, i32) {
    %c0_i32 = arith.constant 0 : i32
    %c0_i32_0 = arith.constant 0 : i32
    return %arg0, %c0_i32 : i32, i32
  }
}

</mosaic_0001>

<llo_original>
// kernel: tpu_custom_call.1
$region0: #{tpu_custom_call.1}
  #allocation0 [shape = 'u32[]', space=smem, size = 0x4, offset = 0x4, fixed_abs, tag = 'smem constant byte address 0x4 - core index']
  #allocation1 [shape = 'u32[144,128]{1,0:T(1,128)}', space=vmem, size = 0x12000, scoped, tag = 'internal scratch']
  #allocation2 [shape = 'f32[1,1]{1,0:T(1,128)S(1)}', space=vmem, size = 0x200, scoped, tag = 'scoped memory for tpu_custom_call.1']
  %s0 = inlined_call_operand.vmem [shape: f32[1,256], index: 0, kind: input, shape index: {}]
  %s1 = inlined_call_operand.hbm [shape: f32[256,128], index: 1, kind: input, shape index: {}]
  %s2 = inlined_call_operand.vmem [shape: f32[1,128], index: 2, kind: input, shape index: {}]
  %s3 = inlined_call_operand.vmem [shape: f32[128,8], index: 3, kind: input, shape index: {}]
  %s4 = inlined_call_operand.<no memory space> [shape: f32[1,1], index: 4, kind: input, shape index: {}]
  %s5 = inlined_call_operand.hbm [shape: f32[1,8], index: 5, kind: output, shape index: {}]
  %s6 = sld [smem:[#allocation0]]
  $region34: #{tpu_custom_call.1} parent=0
    _
  %s8 = ssub.s32 1, %s6
  %s9 = scalar_select 0, %s8, %s6
  %v10 = vstv %s4
  %11 = vst [vmem:[#allocation2] sm:$0x1] %v10
  $region1: #{tpu_custom_call.1} parent=0
    #allocation3 [shape = 'u8[131072]{0}', space=vmem, size = 0x20000, scoped, tag = 'input window, operand 1, single buffered']
    #allocation4 [shape = 's32[1]{0}', space=sflag, size = 0x4, scoped, tag = 'scoped memory for tpu_custom_call.1']
    #allocation5 [shape = 's32[1]{0}', space=sflag, size = 0x4, scoped, tag = 'scoped memory for tpu_custom_call.1']
    #allocation6 [shape = 'u8[512]{0}', space=vmem, size = 0x400, scoped, tag = 'output window, operand 0, single buffered']
    %12 = vsyncpa [#allocation4], 0
    %13 = vsyncpa [#allocation5], 0
    // Predicated region
    $region2: #{tpu_custom_call.1} parent=1 // pred_check
      _
    $region3: #{tpu_custom_call.1} parent=1 // pred_check_branch
      %15 = sbr.rel (0) target = $region5
    $region4: #{tpu_custom_call.1} parent=1 // pred_region
      _
    $region5: #{tpu_custom_call.1} parent=1 // pred_fallthru
      _
    // Predicated region
    $region6: #{tpu_custom_call.1} parent=1 // pred_check
      _
    $region7: #{tpu_custom_call.1} parent=1 // pred_check_branch
      %17 = sbr.rel (0) target = $region9
    $region8: #{tpu_custom_call.1} parent=1 // pred_region
      %s19 = ssub.s32 4096, 4096
      %20 = vsyncadd [#allocation4], %s19
      %s21 = sshll.u32 [#allocation3], 4
      %s22 = int_to_ptr.vmem [resolvable:$true] %s21
      %27 = dma.hbm_to_vmem [thread:$0]  %s1, 4096, %s22, [#allocation4], 128, 128, 8
    $region9: #{tpu_custom_call.1} parent=1 // pred_fallthru
      _
    // Predicated region
    $region10: #{tpu_custom_call.1} parent=1 // pred_check
      _
    $region11: #{tpu_custom_call.1} parent=1 // pred_check_branch
      %29 = sbr.rel (0) target = $region13
    $region12: #{tpu_custom_call.1} parent=1 // pred_region
      _
    $region13: #{tpu_custom_call.1} parent=1 // pred_fallthru
      _
    // Predicated region
    $region14: #{tpu_custom_call.1} parent=1 // pred_check
      _
    $region15: #{tpu_custom_call.1} parent=1 // pred_check_branch
      %31 = sbr.rel (0) target = $region17
    $region16: #{tpu_custom_call.1} parent=1 // pred_region
      _
    $region17: #{tpu_custom_call.1} parent=1 // pred_fallthru
      _
    // Predicated region
    $region18: #{tpu_custom_call.1} parent=1 // pred_check
      _
    $region19: #{tpu_custom_call.1} parent=1 // pred_check_branch
      %33 = sbr.rel (0) target = $region21
    $region20: #{tpu_custom_call.1} parent=1 // pred_region
      _
    $region21: #{tpu_custom_call.1} parent=1 // pred_fallthru
      _
    // Predicated region
    $region22: #{tpu_custom_call.1} parent=1 // pred_check
      _
    $region23: #{tpu_custom_call.1} parent=1 // pred_check_branch
      %35 = sbr.rel (0) target = $region25
    $region24: #{tpu_custom_call.1} parent=1 // pred_region
      %36 = dma.done [#allocation4], 4096
    $region25: #{tpu_custom_call.1} parent=1 // pred_fallthru
      _
    %v37 = vld [vmem:[%s0] sm:$0x3]
    %v38 = vld [vmem:[#allocation3] sm:$0xff]
    %v39 = vld [vmem:[#allocation3 + $0x8] sm:$0xff]
    %v40 = vld [vmem:[#allocation3 + $0x10] sm:$0xff]
    %v41 = vld [vmem:[#allocation3 + $0x18] sm:$0xff]
    %v42 = vld [vmem:[#allocation3 + $0x20] sm:$0xff]
    %v43 = vld [vmem:[#allocation3 + $0x28] sm:$0xff]
    %v44 = vld [vmem:[#allocation3 + $0x30] sm:$0xff]
    %v45 = vld [vmem:[#allocation3 + $0x38] sm:$0xff]
    %v46 = vld [vmem:[#allocation3 + $0x40] sm:$0xff]
    %v47 = vld [vmem:[#allocation3 + $0x48] sm:$0xff]
    %v48 = vld [vmem:[#allocation3 + $0x50] sm:$0xff]
    %v49 = vld [vmem:[#allocation3 + $0x58] sm:$0xff]
    %v50 = vld [vmem:[#allocation3 + $0x60] sm:$0xff]
    %v51 = vld [vmem:[#allocation3 + $0x68] sm:$0xff]
    %v52 = vld [vmem:[#allocation3 + $0x70] sm:$0xff]
    %v53 = vld [vmem:[#allocation3 + $0x78] sm:$0xff]
    %v54 = vld [vmem:[#allocation3 + $0x80] sm:$0xff]
    %v55 = vld [vmem:[#allocation3 + $0x88] sm:$0xff]
    %v56 = vld [vmem:[#allocation3 + $0x90] sm:$0xff]
    %v57 = vld [vmem:[#allocation3 + $0x98] sm:$0xff]
    %v58 = vld [vmem:[#allocation3 + $0xa0] sm:$0xff]
    %v59 = vld [vmem:[#allocation3 + $0xa8] sm:$0xff]
    %v60 = vld [vmem:[#allocation3 + $0xb0] sm:$0xff]
    %v61 = vld [vmem:[#allocation3 + $0xb8] sm:$0xff]
    %v62 = vld [vmem:[#allocation3 + $0xc0] sm:$0xff]
    %v63 = vld [vmem:[#allocation3 + $0xc8] sm:$0xff]
    %v64 = vld [vmem:[#allocation3 + $0xd0] sm:$0xff]
    %v65 = vld [vmem:[#allocation3 + $0xd8] sm:$0xff]
    %v66 = vld [vmem:[#allocation3 + $0xe0] sm:$0xff]
    %v67 = vld [vmem:[#allocation3 + $0xe8] sm:$0xff]
    %v68 = vld [vmem:[#allocation3 + $0xf0] sm:$0xff]
    %v69 = vld [vmem:[#allocation3 + $0xf8] sm:$0xff]
    %v70 = vld [vmem:[%s2] sm:$0x1]
    %v72 = vlaneseq
    %v73 = vshrl.u32 %v72, 7
    %v74 = vsub.s32 0, %v73
    %v75 = vrot.slane %v37, %v74
    %v76 = vlaneseq
    %v77 = vshrl.u32 %v76, 7
    %v78 = vsub.s32 1, %v77
    %v79 = vrot.slane %v37, %v78
    %82 = vmatprep.subr.mxu0 0.0
    %83 = vmatpush1.msra.mxu0 %v38
    %84 = vmatprep.subr.mxu0 0.0
    %85 = vmatpush1.msra.mxu0 %v39
    %86 = vmatprep.subr.mxu0 0.0
    %87 = vmatpush1.msra.mxu0 %v40
    %88 = vmatprep.subr.mxu0 0.0
    %89 = vmatpush1.msra.mxu0 %v41
    %90 = vmatprep.subr.mxu0 0.0
    %91 = vmatpush1.msra.mxu0 %v42
    %92 = vmatprep.subr.mxu0 0.0
    %93 = vmatpush1.msra.mxu0 %v43
    %94 = vmatprep.subr.mxu0 0.0
    %95 = vmatpush1.msra.mxu0 %v44
    %96 = vmatprep.subr.mxu0 0.0
    %97 = vmatpush1.msra.mxu0 %v45
    %98 = vmatprep.subr.mxu0 0.0
    %99 = vmatpush1.msra.mxu0 %v46
    %100 = vmatprep.subr.mxu0 0.0
    %101 = vmatpush1.msra.mxu0 %v47
    %102 = vmatprep.subr.mxu0 0.0
    %103 = vmatpush1.msra.mxu0 %v48
    %104 = vmatprep.subr.mxu0 0.0
    %105 = vmatpush1.msra.mxu0 %v49
    %106 = vmatprep.subr.mxu0 0.0
    %107 = vmatpush1.msra.mxu0 %v50
    %108 = vmatprep.subr.mxu0 0.0
    %109 = vmatpush1.msra.mxu0 %v51
    %110 = vmatprep.subr.mxu0 0.0
    %111 = vmatpush1.msra.mxu0 %v52
    %112 = vmatprep.subr.mxu0 0.0
    %113 = vmatpush1.msra.mxu0 %v53
    %114 = vmatprep.subr.mxu0 0.0
    %115 = vmatpush1.msra.mxu0 %v54
    %116 = vmatprep.subr.mxu0 0.0
    %117 = vmatpush1.msra.mxu0 %v55
    %118 = vmatprep.subr.mxu0 0.0
    %119 = vmatpush1.msra.mxu0 %v56
    %120 = vmatprep.subr.mxu0 0.0
    %121 = vmatpush1.msra.mxu0 %v57
    %122 = vmatprep.subr.mxu0 0.0
    %123 = vmatpush1.msra.mxu0 %v58
    %124 = vmatprep.subr.mxu0 0.0
    %125 = vmatpush1.msra.mxu0 %v59
    %126 = vmatprep.subr.mxu0 0.0
    %127 = vmatpush1.msra.mxu0 %v60
    %128 = vmatprep.subr.mxu0 0.0
    %129 = vmatpush1.msra.mxu0 %v61
    %130 = vmatprep.subr.mxu0 0.0
    %131 = vmatpush1.msra.mxu0 %v62
    %132 = vmatprep.subr.mxu0 0.0
    %133 = vmatpush1.msra.mxu0 %v63
    %134 = vmatprep.subr.mxu0 0.0
    %135 = vmatpush1.msra.mxu0 %v64
    %136 = vmatprep.subr.mxu0 0.0
    %137 = vmatpush1.msra.mxu0 %v65
    %138 = vmatprep.subr.mxu0 0.0
    %139 = vmatpush1.msra.mxu0 %v66
    %140 = vmatprep.subr.mxu0 0.0
    %141 = vmatpush1.msra.mxu0 %v67
    %142 = vmatprep.subr.mxu0 0.0
    %143 = vmatpush1.msra.mxu0 %v68
    %144 = vmatprep.subr.mxu0 0.0
    %145 = vmatpush1.msra.mxu0 %v69
    %146 = vmatprep.mubr.f32.mxu0 %v79
    %147 = vmatmul.mubr.f32.gmra.mrb[0].mxu0 %v75
    %v148 = vpop.f32.mrb[0].mxu0
    %v149 = vadd.f32 %v70, %v148
    %v150 = vpop.f32.mrb[0].mxu0
    %151 = vdwg.mxu0
    %v152 = vmax.f32 %v149, 0.0
    %v153 = vld [vmem:[%s3] sm:$0xff]
    %v154 = vld [vmem:[%s3 + $0x8] sm:$0xff]
    %v155 = vld [vmem:[%s3 + $0x10] sm:$0xff]
    %v156 = vld [vmem:[%s3 + $0x18] sm:$0xff]
    %v157 = vld [vmem:[%s3 + $0x20] sm:$0xff]
    %v158 = vld [vmem:[%s3 + $0x28] sm:$0xff]
    %v159 = vld [vmem:[%s3 + $0x30] sm:$0xff]
    %v160 = vld [vmem:[%s3 + $0x38] sm:$0xff]
    %v161 = vld [vmem:[%s3 + $0x40] sm:$0xff]
    %v162 = vld [vmem:[%s3 + $0x48] sm:$0xff]
    %v163 = vld [vmem:[%s3 + $0x50] sm:$0xff]
    %v164 = vld [vmem:[%s3 + $0x58] sm:$0xff]
    %v165 = vld [vmem:[%s3 + $0x60] sm:$0xff]
    %v166 = vld [vmem:[%s3 + $0x68] sm:$0xff]
    %v167 = vld [vmem:[%s3 + $0x70] sm:$0xff]
    %v168 = vld [vmem:[%s3 + $0x78] sm:$0xff]
    %v169 = vld [vmem:[#allocation2] sm:$0x1]
    %171 = vset.pattern.permute.xlu0 0
    %172 = vperm.xlu0 %171, %v169
    %v173 = vpop.permute.xlu0 %172
    %v175 = vlaneseq
    %v176 = vshrl.u32 %v175, 7
    %v177 = vsub.s32 0, %v176
    %v178 = vrot.slane %v173, %v177
    %179 = vmatprep.subr.mxu0 0.0
    %180 = vmatpush1.msra.mxu0 %v153
    %181 = vmatprep.subr.mxu0 0.0
    %182 = vmatpush1.msra.mxu0 %v154
    %183 = vmatprep.subr.mxu0 0.0
    %184 = vmatpush1.msra.mxu0 %v155
    %185 = vmatprep.subr.mxu0 0.0
    %186 = vmatpush1.msra.mxu0 %v156
    %187 = vmatprep.subr.mxu0 0.0
    %188 = vmatpush1.msra.mxu0 %v157
    %189 = vmatprep.subr.mxu0 0.0
    %190 = vmatpush1.msra.mxu0 %v158
    %191 = vmatprep.subr.mxu0 0.0
    %192 = vmatpush1.msra.mxu0 %v159
    %193 = vmatprep.subr.mxu0 0.0
    %194 = vmatpush1.msra.mxu0 %v160
    %195 = vmatprep.subr.mxu0 0.0
    %196 = vmatpush1.msra.mxu0 %v161
    %197 = vmatprep.subr.mxu0 0.0
    %198 = vmatpush1.msra.mxu0 %v162
    %199 = vmatprep.subr.mxu0 0.0
    %200 = vmatpush1.msra.mxu0 %v163
    %201 = vmatprep.subr.mxu0 0.0
    %202 = vmatpush1.msra.mxu0 %v164
    %203 = vmatprep.subr.mxu0 0.0
    %204 = vmatpush1.msra.mxu0 %v165
    %205 = vmatprep.subr.mxu0 0.0
    %206 = vmatpush1.msra.mxu0 %v166
    %207 = vmatprep.subr.mxu0 0.0
    %208 = vmatpush1.msra.mxu0 %v167
    %209 = vmatprep.subr.mxu0 0.0
    %210 = vmatpush1.msra.mxu0 %v168
    %211 = vmatprep.subr.mxu0 0.0
    %212 = vmatpush1.msra.mxu0 0.0
    %213 = vmatprep.subr.mxu0 0.0
    %214 = vmatpush1.msra.mxu0 0.0
    %215 = vmatprep.subr.mxu0 0.0
    %216 = vmatpush1.msra.mxu0 0.0
    %217 = vmatprep.subr.mxu0 0.0
    %218 = vmatpush1.msra.mxu0 0.0
    %219 = vmatprep.subr.mxu0 0.0
    %220 = vmatpush1.msra.mxu0 0.0
    %221 = vmatprep.subr.mxu0 0.0
    %222 = vmatpush1.msra.mxu0 0.0
    %223 = vmatprep.subr.mxu0 0.0
    %224 = vmatpush1.msra.mxu0 0.0
    %225 = vmatprep.subr.mxu0 0.0
    %226 = vmatpush1.msra.mxu0 0.0
    %227 = vmatprep.subr.mxu0 0.0
    %228 = vmatpush1.msra.mxu0 0.0
    %229 = vmatprep.subr.mxu0 0.0
    %230 = vmatpush1.msra.mxu0 0.0
    %231 = vmatprep.subr.mxu0 0.0
    %232 = vmatpush1.msra.mxu0 0.0
    %233 = vmatprep.subr.mxu0 0.0
    %234 = vmatpush1.msra.mxu0 0.0
    %235 = vmatprep.subr.mxu0 0.0
    %236 = vmatpush1.msra.mxu0 0.0
    %237 = vmatprep.subr.mxu0 0.0
    %238 = vmatpush1.msra.mxu0 0.0
    %239 = vmatprep.subr.mxu0 0.0
    %240 = vmatpush1.msra.mxu0 0.0
    %241 = vmatprep.subr.mxu0 0.0
    %242 = vmatpush1.msra.mxu0 0.0
    %243 = vmatprep.mubr.f32.mxu0 0.0
    %244 = vmatmul.mubr.f32.gmra.mrb[0].mxu0 %v152
    %v245 = vpop.f32.mrb[0].mxu0
    %v246 = vadd.f32 %v178, %v245
    %v247 = vpop.f32.mrb[0].mxu0
    %248 = vdwg.mxu0
    %vm249 = vcmask 57344
    %250 = vst.msk [vmem:[#allocation6] sm:$0x1] %vm249, %v246
    // Predicated region
    $region26: #{tpu_custom_call.1} parent=1 // pred_check
      _
    $region27: #{tpu_custom_call.1} parent=1 // pred_check_branch
      %252 = sbr.rel (0) target = $region29
    $region28: #{tpu_custom_call.1} parent=1 // pred_region
      %s254 = ssub.s32 16, 16
      %255 = vsyncadd [#allocation5], %s254
      %s257 = sshll.u32 [#allocation6], 4
      %s258 = int_to_ptr.vmem [resolvable:$true] %s257
      %260 = dma.vmem_to_hbm [thread:$0]  %s258, 16, %s5, [#allocation5]
    $region29: #{tpu_custom_call.1} parent=1 // pred_fallthru
      _
    // Predicated region
    $region30: #{tpu_custom_call.1} parent=1 // pred_check
      _
    $region31: #{tpu_custom_call.1} parent=1 // pred_check_branch
      %262 = sbr.rel (0) target = $region33
    $region32: #{tpu_custom_call.1} parent=1 // pred_region
      %263 = dma.done [#allocation5], 16
    $region33: #{tpu_custom_call.1} parent=1 // pred_fallthru
      _
    %264 = vsyncpa [#allocation4], 1
    %265 = vsyncpa [#allocation5], 1

</llo_original>
